<compile_context>
chip_gen: v5e
topology: v5e:2x2
jax: 0.10.0
libtpu: 0.0.40
codegen_flags: <defaults>
</compile_context>

<pallas_src>
import jax
import jax.numpy as jnp
from jax import lax
from jax.experimental import pallas as pl
from jax.experimental.pallas import tpu as pltpu


def _round_up(x: int, m: int) -> int:
    return ((x + m - 1) // m) * m


def _choose_tiles(N, C, itemsize, tile_n=None, tile_c=None,
                  target_bytes=6 * 1024 * 1024):
    """Pick (tile_n, tile_c) aiming at ~6 MiB per logits block.

    tile_c == C (full class row) whenever a minimal-height full-C block fits the
    budget; otherwise the class axis is chunked in lane-dense multiples of 128.
    """
    sub = {4: 8, 2: 16, 1: 32}.get(itemsize, 8)   # sublane multiple per dtype
    if tile_c is None:
        if C * itemsize * sub <= target_bytes:
            tile_c = C
        else:
            tile_c = min(_round_up(C, 128), 8192)
    if tile_n is None:
        tile_n = max(sub, (target_bytes // max(tile_c * itemsize, 1)) // sub * sub)
        tile_n = min(tile_n, _round_up(N, sub))
    return tile_n, tile_c


def _make_ce_kernel(N, C, tile_n, tile_c):
    mask_cols = (C % tile_c) != 0   # static: boundary class chunk has padding

    def kernel(x_ref, t_ref, loss_ref, m_sc, l_sc, xt_sc):
        j = pl.program_id(1)        # class-chunk index (innermost, "arbitrary")

        @pl.when(j == 0)
        def _init():
            m_sc[...] = jnp.full_like(m_sc, -jnp.inf)
            l_sc[...] = jnp.zeros_like(l_sc)
            xt_sc[...] = jnp.zeros_like(xt_sc)

        x = x_ref[...].astype(jnp.float32)          # (tile_n, tile_c)
        t = t_ref[...]                              # (tile_n, 1) int32

        # Global column ids for this chunk: single lane-row iota, broadcast in
        # the compares (no full (tile_n, tile_c) iota materialized).
        col = j * tile_c + lax.broadcasted_iota(jnp.int32, (1, tile_c), 1)
        if mask_cols:
            x = jnp.where(col < C, x, -jnp.inf)     # neutralize padded classes

        # Online (streaming) log-sum-exp over class chunks.
        m_prev = m_sc[...]
        m_new = jnp.maximum(m_prev, jnp.max(x, axis=1, keepdims=True))
        l_sc[...] = (l_sc[...] * jnp.exp(m_prev - m_new)
                     + jnp.sum(jnp.exp(x - m_new), axis=1, keepdims=True))
        m_sc[...] = m_new

        # Target logit: fused compare+select, only hits when the target class
        # lives in the resident chunk.
        xt_sc[...] += jnp.sum(jnp.where(col == t, x, 0.0), axis=1, keepdims=True)

        @pl.when(j == pl.num_programs(1) - 1)
        def _finalize():
            # loss_i = lse_i - x_i[t_i]; padded boundary rows are never written
            # back (partial output block is clipped to the true N).
            loss_ref[...] = m_sc[...] + jnp.log(l_sc[...]) - xt_sc[...]

    return kernel


def cross_entropy_loss_define(inputs, targets, *, tile_n=None, tile_c=None):
    """inputs: (N, C) float32/bfloat16 logits, targets: (N,) int -> scalar loss."""
    N, C = inputs.shape
    itemsize = jnp.dtype(inputs.dtype).itemsize
    tile_n, tile_c = _choose_tiles(N, C, itemsize, tile_n=tile_n, tile_c=tile_c)

    t2d = targets.reshape(N, 1).astype(jnp.int32)
    grid = (pl.cdiv(N, tile_n), pl.cdiv(C, tile_c))

    loss_rows = pl.pallas_call(
        _make_ce_kernel(N, C, tile_n, tile_c),
        out_shape=jax.ShapeDtypeStruct((N, 1), jnp.float32),
        grid=grid,
        in_specs=[
            pl.BlockSpec((tile_n, tile_c), lambda i, j: (i, j)),   # logits chunk
            pl.BlockSpec((tile_n, 1), lambda i, j: (i, 0)),        # targets tile
        ],
        out_specs=pl.BlockSpec((tile_n, 1), lambda i, j: (i, 0)),  # per-row loss
        scratch_shapes=[pltpu.VMEM((tile_n, 1), jnp.float32),      # running max
                        pltpu.VMEM((tile_n, 1), jnp.float32),      # running sum
                        pltpu.VMEM((tile_n, 1), jnp.float32)],     # target logit
        compiler_params=pltpu.CompilerParams(
            dimension_semantics=("parallel", "arbitrary"),
            vmem_limit_bytes=32 * 1024 * 1024,
        ),
    )(inputs, t2d)

    # size_average=True -> mean over the batch (pairwise reduce in the wrapper).
    return jnp.mean(loss_rows)


def _reference_loss(inputs, targets):
    log_p = jax.nn.log_softmax(inputs.astype(jnp.float32), axis=1)
    picked = jnp.take_along_axis(log_p, targets[:, None].astype(jnp.int32), axis=1)
    return jnp.mean(-picked)


if __name__ == "__main__":
    key = jax.random.PRNGKey(0)
    k_x1, k_t1, k_x2, k_t2, k_x3, k_t3 = jax.random.split(key, 6)

    # 1) Small single-tile shape consistent with (batch, num_classes) logits.
    N1, C1 = 8, 32
    x1 = jax.random.normal(k_x1, (N1, C1), dtype=jnp.float32)
    t1 = jax.random.randint(k_t1, (N1,), 0, C1, dtype=jnp.int32)
    loss1 = cross_entropy_loss_define(x1, t1)
    jax.block_until_ready(loss1)
    ref1 = _reference_loss(x1, t1)
    assert jnp.allclose(loss1, ref1, rtol=1e-5, atol=1e-4), (loss1, ref1)

    # 2) Multiple row tiles + partial boundary tile (parallel N axis path).
    N2, C2 = 100, 48
    x2 = 4.0 * jax.random.normal(k_x2, (N2, C2), dtype=jnp.float32)
    t2 = jax.random.randint(k_t2, (N2,), 0, C2, dtype=jnp.int32)
    loss2 = cross_entropy_loss_define(x2, t2, tile_n=32)
    jax.block_until_ready(loss2)
    ref2 = _reference_loss(x2, t2)
    assert jnp.allclose(loss2, ref2, rtol=1e-5, atol=1e-4), (loss2, ref2)

    # 3) Class-axis chunking path (online logsumexp + padded boundary chunk).
    N3, C3 = 64, 640
    x3 = 4.0 * jax.random.normal(k_x3, (N3, C3), dtype=jnp.float32)
    t3 = jax.random.randint(k_t3, (N3,), 0, C3, dtype=jnp.int32)
    loss3 = cross_entropy_loss_define(x3, t3, tile_c=256)
    jax.block_until_ready(loss3)
    ref3 = _reference_loss(x3, t3)
    assert jnp.allclose(loss3, ref3, rtol=1e-5, atol=1e-4), (loss3, ref3)

    # 4) bfloat16 logits at the boundary (math stays f32 inside the kernel).
    x4 = x2.astype(jnp.bfloat16)
    loss4 = cross_entropy_loss_define(x4, t2)
    jax.block_until_ready(loss4)
    ref4 = _reference_loss(x4, t2)
    assert jnp.allclose(loss4, ref4, rtol=1e-5, atol=1e-4), (loss4, ref4)

    print("KERNEL_OK")
</pallas_src>

<mosaic_0001>
module attributes {stable_mosaic.version = 11 : i64} {
  func.func @kernel(%arg0: i32, %arg1: i32, %arg2: memref<8x32xf32, #tpu.memory_space<vmem>>, %arg3: memref<8x1xi32, #tpu.memory_space<vmem>>, %arg4: memref<8x1xf32, #tpu.memory_space<vmem>>, %arg5: memref<8x1xf32, #tpu.memory_space<vmem>>, %arg6: memref<8x1xf32, #tpu.memory_space<vmem>>, %arg7: memref<8x1xf32, #tpu.memory_space<vmem>>) attributes {dimension_semantics = [#tpu.dimension_semantics<parallel>, #tpu.dimension_semantics<arbitrary>], iteration_bounds = array<i64: 1, 1>, scalar_prefetch = 0 : i64, scratch_operands = 3 : i64, tpu.core_type = #tpu.core_type<tc>, window_params = [{transform_indices = @transform_0, window_bounds = array<i64: 8, 32>}, {transform_indices = @transform_1, window_bounds = array<i64: 8, 1>}, {transform_indices = @transform_2, window_bounds = array<i64: 8, 1>}]} {
    %c0_i32 = arith.constant 0 : i32
    %0 = arith.cmpi eq, %arg1, %c0_i32 : i32
    %1 = arith.extui %0 : i1 to i32
    %c0_i32_0 = arith.constant 0 : i32
    %2 = arith.cmpi ne, %1, %c0_i32_0 : i32
    scf.if %2 {
      %cst_21 = arith.constant 0xFF800000 : f32
      %38 = vector.broadcast %cst_21 : f32 to vector<8x1xf32>
      %c0_22 = arith.constant 0 : index
      %c0_23 = arith.constant 0 : index
      %39 = vector.load %arg5[%c0_22, %c0_23] : memref<8x1xf32, #tpu.memory_space<vmem>>, vector<8x1xf32>
      tpu.vector_store %arg5[%c0_22, %c0_23], %38 {strides = array<i32>} : memref<8x1xf32, #tpu.memory_space<vmem>>, vector<8x1xf32>,
      %cst_24 = arith.constant 0.000000e+00 : f32
      %40 = vector.broadcast %cst_24 : f32 to vector<8x1xf32>
      %c0_25 = arith.constant 0 : index
      %c0_26 = arith.constant 0 : index
      %41 = vector.load %arg6[%c0_25, %c0_26] : memref<8x1xf32, #tpu.memory_space<vmem>>, vector<8x1xf32>
      tpu.vector_store %arg6[%c0_25, %c0_26], %40 {strides = array<i32>} : memref<8x1xf32, #tpu.memory_space<vmem>>, vector<8x1xf32>,
      %cst_27 = arith.constant 0.000000e+00 : f32
      %42 = vector.broadcast %cst_27 : f32 to vector<8x1xf32>
      %c0_28 = arith.constant 0 : index
      %c0_29 = arith.constant 0 : index
      %43 = vector.load %arg7[%c0_28, %c0_29] : memref<8x1xf32, #tpu.memory_space<vmem>>, vector<8x1xf32>
      tpu.vector_store %arg7[%c0_28, %c0_29], %42 {strides = array<i32>} : memref<8x1xf32, #tpu.memory_space<vmem>>, vector<8x1xf32>,
    } else {
    }
    %c0 = arith.constant 0 : index
    %c0_1 = arith.constant 0 : index
    %3 = vector.load %arg2[%c0, %c0_1] : memref<8x32xf32, #tpu.memory_space<vmem>>, vector<8x32xf32>
    %c0_2 = arith.constant 0 : index
    %c0_3 = arith.constant 0 : index
    %4 = vector.load %arg3[%c0_2, %c0_3] : memref<8x1xi32, #tpu.memory_space<vmem>>, vector<8x1xi32>
    %c32_i32 = arith.constant 32 : i32
    %5 = arith.muli %arg1, %c32_i32 : i32
    %6 = tpu.iota {dimensions = array<i32: 1>} : vector<1x32xi32>
    %7 = vector.broadcast %5 : i32 to vector<1x32xi32>
    %8 = arith.addi %7, %6 : vector<1x32xi32>
    %c0_4 = arith.constant 0 : index
    %c0_5 = arith.constant 0 : index
    %9 = vector.load %arg5[%c0_4, %c0_5] : memref<8x1xf32, #tpu.memory_space<vmem>>, vector<8x1xf32>
    %cst = arith.constant dense<0xFF800000> : vector<8xf32>
    %10 = vector.multi_reduction <maximumf>, %3, %cst [1] : vector<8x32xf32> to vector<8xf32>
    %11 = vector.shape_cast %10 : vector<8xf32> to vector<8x1xf32>
    %12 = arith.maximumf %9, %11 : vector<8x1xf32>
    %c0_6 = arith.constant 0 : index
    %c0_7 = arith.constant 0 : index
    %13 = vector.load %arg6[%c0_6, %c0_7] : memref<8x1xf32, #tpu.memory_space<vmem>>, vector<8x1xf32>
    %14 = arith.subf %9, %12 : vector<8x1xf32>
    %15 = math.exp %14 : vector<8x1xf32>
    %16 = arith.mulf %13, %15 : vector<8x1xf32>
    %17 = vector.broadcast %12 : vector<8x1xf32> to vector<8x32xf32>
    %18 = arith.subf %3, %17 : vector<8x32xf32>
    %19 = math.exp %18 : vector<8x32xf32>
    %cst_8 = arith.constant dense<0.000000e+00> : vector<8xf32>
    %20 = vector.multi_reduction <add>, %19, %cst_8 [1] : vector<8x32xf32> to vector<8xf32>
    %21 = vector.shape_cast %20 : vector<8xf32> to vector<8x1xf32>
    %22 = arith.addf %16, %21 : vector<8x1xf32>
    %c0_9 = arith.constant 0 : index
    %c0_10 = arith.constant 0 : index
    %23 = vector.load %arg6[%c0_9, %c0_10] : memref<8x1xf32, #tpu.memory_space<vmem>>, vector<8x1xf32>
    tpu.vector_store %arg6[%c0_9, %c0_10], %22 {strides = array<i32>} : memref<8x1xf32, #tpu.memory_space<vmem>>, vector<8x1xf32>,
    %c0_11 = arith.constant 0 : index
    %c0_12 = arith.constant 0 : index
    %24 = vector.load %arg5[%c0_11, %c0_12] : memref<8x1xf32, #tpu.memory_space<vmem>>, vector<8x1xf32>
    tpu.vector_store %arg5[%c0_11, %c0_12], %12 {strides = array<i32>} : memref<8x1xf32, #tpu.memory_space<vmem>>, vector<8x1xf32>,
    %c0_13 = arith.constant 0 : index
    %c0_14 = arith.constant 0 : index
    %25 = vector.load %arg7[%c0_13, %c0_14] : memref<8x1xf32, #tpu.memory_space<vmem>>, vector<8x1xf32>
    %26 = vector.broadcast %8 : vector<1x32xi32> to vector<8x32xi32>
    %27 = vector.broadcast %4 : vector<8x1xi32> to vector<8x32xi32>
    %28 = arith.cmpi eq, %26, %27 : vector<8x32xi32>
    %cst_15 = arith.constant 0.000000e+00 : f32
    %29 = vector.broadcast %cst_15 : f32 to vector<8x32xf32>
    %30 = arith.select %28, %3, %29 : vector<8x32xi1>, vector<8x32xf32>
    %cst_16 = arith.constant dense<0.000000e+00> : vector<8xf32>
    %31 = vector.multi_reduction <add>, %30, %cst_16 [1] : vector<8x32xf32> to vector<8xf32>
    %32 = vector.shape_cast %31 : vector<8xf32> to vector<8x1xf32>
    %33 = arith.addf %25, %32 : vector<8x1xf32>
    %c0_17 = arith.constant 0 : index
    %c0_18 = arith.constant 0 : index
    %34 = vector.load %arg7[%c0_17, %c0_18] : memref<8x1xf32, #tpu.memory_space<vmem>>, vector<8x1xf32>
    tpu.vector_store %arg7[%c0_17, %c0_18], %33 {strides = array<i32>} : memref<8x1xf32, #tpu.memory_space<vmem>>, vector<8x1xf32>,
    %c0_i32_19 = arith.constant 0 : i32
    %35 = arith.cmpi eq, %arg1, %c0_i32_19 : i32
    %36 = arith.extui %35 : i1 to i32
    %c0_i32_20 = arith.constant 0 : i32
    %37 = arith.cmpi ne, %36, %c0_i32_20 : i32
    scf.if %37 {
      %c0_21 = arith.constant 0 : index
      %c0_22 = arith.constant 0 : index
      %38 = vector.load %arg5[%c0_21, %c0_22] : memref<8x1xf32, #tpu.memory_space<vmem>>, vector<8x1xf32>
      %c0_23 = arith.constant 0 : index
      %c0_24 = arith.constant 0 : index
      %39 = vector.load %arg6[%c0_23, %c0_24] : memref<8x1xf32, #tpu.memory_space<vmem>>, vector<8x1xf32>
      %40 = math.log %39 : vector<8x1xf32>
      %41 = arith.addf %38, %40 : vector<8x1xf32>
      %c0_25 = arith.constant 0 : index
      %c0_26 = arith.constant 0 : index
      %42 = vector.load %arg7[%c0_25, %c0_26] : memref<8x1xf32, #tpu.memory_space<vmem>>, vector<8x1xf32>
      %43 = arith.subf %41, %42 : vector<8x1xf32>
      %c0_27 = arith.constant 0 : index
      %c0_28 = arith.constant 0 : index
      %44 = vector.load %arg4[%c0_27, %c0_28] : memref<8x1xf32, #tpu.memory_space<vmem>>, vector<8x1xf32>
      tpu.vector_store %arg4[%c0_27, %c0_28], %43 {strides = array<i32>} : memref<8x1xf32, #tpu.memory_space<vmem>>, vector<8x1xf32>,
    } else {
    }
    return
  }
  func.func @transform_0(%arg0: i32, %arg1: i32) -> (i32, i32) {
    %c0_i32 = arith.constant 0 : i32
    return %arg0, %arg1 : i32, i32
  }
  func.func @transform_1(%arg0: i32, %arg1: i32) -> (i32, i32) {
    %c0_i32 = arith.constant 0 : i32
    %c0_i32_0 = arith.constant 0 : i32
    return %arg0, %c0_i32 : i32, i32
  }
  func.func @transform_2(%arg0: i32, %arg1: i32) -> (i32, i32) {
    %c0_i32 = arith.constant 0 : i32
    %c0_i32_0 = arith.constant 0 : i32
    return %arg0, %c0_i32 : i32, i32
  }
}

</mosaic_0001>

<llo_original>
// kernel: tpu_custom_call.1
$region0: #{tpu_custom_call.1}
  #allocation0 [shape = 'u32[]', space=smem, size = 0x4, offset = 0x4, fixed_abs, tag = 'smem constant byte address 0x4 - core index']
  #allocation1 [shape = 'u32[72,128]{1,0:T(1,128)}', space=vmem, size = 0x9000, scoped, tag = 'internal scratch']
  #allocation2 [shape = 'f32[8,1]{1,0:T(8,128)}', space=vmem, size = 0x1000, scoped, tag = 'scratch operand']
  #allocation3 [shape = 'f32[8,1]{1,0:T(8,128)}', space=vmem, size = 0x1000, scoped, tag = 'scratch operand']
  #allocation4 [shape = 'f32[8,1]{1,0:T(8,128)}', space=vmem, size = 0x1000, scoped, tag = 'scratch operand']
  %s0 = inlined_call_operand.vmem [shape: f32[8,32], index: 0, kind: input, shape index: {}]
  %s1 = inlined_call_operand.vmem [shape: s32[8,1], index: 1, kind: input, shape index: {}]
  %s2 = inlined_call_operand.vmem [shape: f32[8,1], index: 2, kind: output, shape index: {}]
  %s3 = sld [smem:[#allocation0]]
  $region26: #{tpu_custom_call.1} parent=0
    _
  %s5 = ssub.s32 1, %s3
  %s6 = scalar_select 0, %s5, %s3
  // Predicated region
  $region2: #{tpu_custom_call.1} parent=0 // pred_check
    _
  $region3: #{tpu_custom_call.1} parent=0 // pred_check_branch
    %8 = sbr.rel (0) target = $region5
  $region4: #{tpu_custom_call.1} parent=0 // pred_region
    _
  $region5: #{tpu_custom_call.1} parent=0 // pred_fallthru
    _
  // Predicated region
  $region6: #{tpu_custom_call.1} parent=0 // pred_check
    _
  $region7: #{tpu_custom_call.1} parent=0 // pred_check_branch
    %10 = sbr.rel (0) target = $region9
  $region8: #{tpu_custom_call.1} parent=0 // pred_region
    _
  $region9: #{tpu_custom_call.1} parent=0 // pred_fallthru
    _
  %p11 = scmp.eq.s32.totalorder 0, 0
  // Predicated region
  $region10: #{tpu_custom_call.1} parent=0 // pred_check
    %p12 = pneg %p11
  $region11: #{tpu_custom_call.1} parent=0 // pred_check_branch
    %14 = sbr.rel (%p12) target = $region13
  $region12: #{tpu_custom_call.1} parent=0 // pred_region
    %vm15 = vcmask 7168
    %16 = vst.msk [vmem:[#allocation2] sm:$0xff] %vm15, -inf
    %17 = vst.msk [vmem:[#allocation3] sm:$0xff] %vm15, 0.0
    %18 = vst.msk [vmem:[#allocation4] sm:$0xff] %vm15, 0.0
  $region13: #{tpu_custom_call.1} parent=0 // pred_fallthru
    _
  %v19 = vld [vmem:[%s0] sm:$0xff]
  %v20 = vld [vmem:[%s1] sm:$0xff]
  %s21 = smul.u32 0, 32
  %v22 = vlaneseq
  %v23 = vand.u32 %v22, 127
  %v24 = vstv %s21
  %v25 = vadd.s32 %v24, %v23
  %v26 = vld [vmem:[#allocation2] sm:$0xff]
  %vm27 = vcmask 261120
  %v28 = vsel %vm27, %v19, -inf
  %29 = vmax.xlane.f32.xlu0 %v28
  %v30 = vpop.xlane.xlu0 %29
  %v31 = vmax.f32 %v26, %v30
  %v32 = vld [vmem:[#allocation3] sm:$0xff]
  %v33 = vsub.f32 %v26, %v31
  %v34 = vmul.f32 %v33, 1.442695
  %v35 = vpow.pop %v34
  %v36 = vmul.f32 %v32, %v35
  %38 = vset.pattern.permute.xlu0 0
  %39 = vperm.xlu0 %38, %v31
  %v40 = vpop.permute.xlu0 %39
  %v42 = vsub.f32 %v19, %v40
  %v43 = vmul.f32 %v42, 1.442695
  %v44 = vpow.pop %v43
  %v45 = vsel %vm27, %v44, 0.0
  %46 = vadd.xlane.f32.xlu0 %v45
  %v47 = vpop.xlane.xlu0 %46
  %v48 = vadd.f32 %v36, %v47
  %vm49 = vcmask 7168
  %50 = vst.msk [vmem:[#allocation3] sm:$0xff] %vm49, %v48
  %51 = vst.msk [vmem:[#allocation2] sm:$0xff] %vm49, %v31
  %v52 = vld [vmem:[#allocation4] sm:$0xff]
  %53 = vset.pattern.permute.xlu0 0
  %54 = vperm.xlu0 %53, %v20
  %v55 = vpop.permute.xlu0 %54
  %vm56 = vcmp.eq.s32.totalorder %v25, %v55
  %v57 = vsel %vm56, %v19, 0.0
  %v58 = vsel %vm27, %v57, 0.0
  %59 = vadd.xlane.f32.xlu0 %v58
  %v60 = vpop.xlane.xlu0 %59
  %v61 = vadd.f32 %v52, %v60
  %62 = vst.msk [vmem:[#allocation4] sm:$0xff] %vm49, %v61
  // Predicated region
  $region14: #{tpu_custom_call.1} parent=0 // pred_check
    %p63 = pneg %p11
  $region15: #{tpu_custom_call.1} parent=0 // pred_check_branch
    %65 = sbr.rel (%p63) target = $region17
  $region16: #{tpu_custom_call.1} parent=0 // pred_region
    %v66 = vld [vmem:[#allocation2] sm:$0xff]
    %v67 = vld [vmem:[#allocation3] sm:$0xff]
    %v68 = vlog2.pop %v67
    %v69 = vmul.f32 %v68, 0.6931472
    %v70 = vadd.f32 %v66, %v69
    %v71 = vld [vmem:[#allocation4] sm:$0xff]
    %v72 = vsub.f32 %v70, %v71
    %73 = vst.msk [vmem:[%s2] sm:$0xff] %vm49, %v72
  $region17: #{tpu_custom_call.1} parent=0 // pred_fallthru
    _
  // Predicated region
  $region18: #{tpu_custom_call.1} parent=0 // pred_check
    _
  $region19: #{tpu_custom_call.1} parent=0 // pred_check_branch
    %75 = sbr.rel (0) target = $region21
  $region20: #{tpu_custom_call.1} parent=0 // pred_region
    _
  $region21: #{tpu_custom_call.1} parent=0 // pred_fallthru
    _
  // Predicated region
  $region22: #{tpu_custom_call.1} parent=0 // pred_check
    _
  $region23: #{tpu_custom_call.1} parent=0 // pred_check_branch
    %77 = sbr.rel (0) target = $region25
  $region24: #{tpu_custom_call.1} parent=0 // pred_region
    _
  $region25: #{tpu_custom_call.1} parent=0 // pred_fallthru
    _

</llo_original>
